<compile_context>
chip_gen: v6e
topology: v6e:2x2x1
jax: 0.10.0
libtpu: 0.0.40
codegen_flags: <defaults>
</compile_context>

<pallas_src>
import functools
import math

import jax
import jax.numpy as jnp
from jax.experimental import pallas as pl
from jax.experimental.pallas import tpu as pltpu

NEG_SLOPE = 0.01   # nn.LeakyReLU default negative_slope
BN_EPS = 1e-5      # nn.BatchNorm1d default eps


def _round_up(n, m):
    return ((n + m - 1) // m) * m


# ---------------------------------------------------------------------------
# Kernel
# ---------------------------------------------------------------------------
def pairnet_kernel(pairs_ref, ious_ref, rhs1_ref, b1_ref, w2_ref, b2_ref, t2_ref,
                   o_ref, *, num_objects):
    cdt = rhs1_ref.dtype                       # MXU streaming dtype (bf16 by default)
    tm = pairs_ref.shape[0]
    kp = rhs1_ref.shape[0]                     # padded 2*O + 1

    # ---- fused layer 1: LHS = [onehot(subj) | onehot(obj) | iou] in one matmul ----
    idx = pairs_ref[...]                                            # (tm, 2) int32
    iou = ious_ref[...]                                             # (tm, 1) f32
    kio = jax.lax.broadcasted_iota(jnp.int32, (tm, kp), 1)
    sel = (kio == idx[:, 0:1]) | (kio == idx[:, 1:2] + num_objects)
    lhs = jnp.where(kio == 2 * num_objects, iou, sel.astype(jnp.float32)).astype(cdt)

    # rhs1 = [feats @ W1a ; feats @ W1b ; w1_iou] (pre-projected on host, BN1-folded).
    h = jnp.dot(lhs, rhs1_ref[...], preferred_element_type=jnp.float32)   # (tm, H) f32
    h = h + b1_ref[...]
    h = jnp.maximum(h, NEG_SLOPE * h)          # LeakyReLU (BN1 scale folded into W1/b1)

    # ---- layer 2: Linear(H -> H), BN2 scale folded; BN2 shift as one add ----
    h = h.astype(cdt)
    h2 = jnp.dot(h, w2_ref[...], preferred_element_type=jnp.float32) + b2_ref[...]
    h2 = jnp.maximum(h2, NEG_SLOPE * h2)
    h2 = h2 + t2_ref[...]
    # TODO(synk): Dropout layers are identity (eval mode).

    o_ref[...] = h2.astype(o_ref.dtype)


# ---------------------------------------------------------------------------
# Host-side pre-projection of feats through the folded W1
# ---------------------------------------------------------------------------
def _build_rhs1(feats, params):
    """RHS for layer 1: [feats @ W1a ; feats @ W1b ; w1_iou] -> (2*O+1, H), MXU dtype."""
    hi = jax.lax.Precision.HIGHEST
    f32 = jnp.float32
    a = jnp.dot(feats.astype(f32), params["w1a"], precision=hi)     # (O, H)
    b = jnp.dot(feats.astype(f32), params["w1b"], precision=hi)     # (O, H)
    rhs = jnp.concatenate([a, b, params["w1i"]], axis=0)            # (2O+1, H)
    return rhs.astype(params["w2"].dtype)


# ---------------------------------------------------------------------------
# Wrapper
# ---------------------------------------------------------------------------
def pairnet_forward(feats, pairs, ious, params, *, tm=1024, out_dtype=jnp.float32):
    """PairNet forward.

    feats : (O, F) float   object features
    pairs : (P, 2) int     [subject, object] indices into feats
    ious  : (P, 1) float
    params: dict from fold_params() (BN pre-folded)
    Returns (P, H) in out_dtype (use jnp.bfloat16 to halve output HBM traffic).
    """
    O, _F = feats.shape
    P = pairs.shape[0]
    H = params["w2"].shape[1]
    cdt = params["w2"].dtype
    if P == 0:
        return jnp.zeros((0, H), out_dtype)

    pairs = pairs.astype(jnp.int32)
    ious = ious.astype(jnp.float32)

    # Pre-project feats through W1 once per call (tiny XLA matmul outside the kernel),
    # pad the contraction dim to a sublane multiple (extra rows are zero).
    rhs1 = _build_rhs1(feats, params)                               # (2O+1, H)
    kp = _round_up(2 * O + 1, 8)
    if kp != rhs1.shape[0]:
        rhs1 = jnp.pad(rhs1, ((0, kp - rhs1.shape[0]), (0, 0)))

    # Batch tiling: large tiles, ragged last block (no host padding, no out[:P] slice).
    tm = max(8, min(_round_up(tm, 8), _round_up(P, 8)))
    if pl.cdiv(P, tm) < 2 and P > 8:
        # v7x: ensure >= 2 grid steps so the "parallel" axis feeds both TensorCores.
        tm = max(8, _round_up(pl.cdiv(P, 2), 8))
    grid = (pl.cdiv(P, tm),)

    # Constant index_map -> operand stays resident in VMEM (not re-DMA'd per step).
    def const(shape):
        return pl.BlockSpec(shape, lambda i: (0, 0))

    cdt_b = jnp.dtype(cdt).itemsize
    out_b = jnp.dtype(out_dtype).itemsize
    cost = pl.CostEstimate(
        flops=int(2 * P * kp * H + 2 * P * H * H + 8 * P * H),
        transcendentals=0,
        bytes_accessed=int(P * (2 * 4 + 4 + H * out_b)
                           + (kp * H + H * H) * cdt_b + 3 * H * 4),
    )

    kernel = functools.partial(pairnet_kernel, num_objects=O)
    return pl.pallas_call(
        kernel,
        out_shape=jax.ShapeDtypeStruct((P, H), out_dtype),
        grid_spec=pltpu.PrefetchScalarGridSpec(
            num_scalar_prefetch=0,
            grid=grid,
            in_specs=[
                pl.BlockSpec((tm, 2), lambda i: (i, 0)),    # pairs tile
                pl.BlockSpec((tm, 1), lambda i: (i, 0)),    # ious tile
                const((kp, H)),                             # [feats@W1a ; feats@W1b ; w1_iou]
                const((1, H)),                              # b1 (BN1-scaled)
                const((H, H)),                              # W2 (BN2-scaled)
                const((1, H)),                              # b2 (incl. folded BN1 shift)
                const((1, H)),                              # BN2 shift
            ],
            out_specs=pl.BlockSpec((tm, H), lambda i: (i, 0)),
        ),
        # NOTE: resident operands are ~(kp + H) * H * 2 bytes (double-buffered) — tiny at
        # H=128. If H scales to multi-K, set vmem_limit_bytes and/or tile W2's N dim.
        compiler_params=pltpu.CompilerParams(dimension_semantics=("parallel",)),
        cost_estimate=cost,
    )(pairs, ious, rhs1, params["b1"], params["w2"], params["b2"], params["t2"])


# ---------------------------------------------------------------------------
# Parameters (mirrors PairNet.__init__ + _init_weight), BN folding
# ---------------------------------------------------------------------------
def init_raw_params(key, feature_dim, hidden_dim):
    """Fresh PairNet parameters; linear weights stored transposed as (in, out)."""
    d_in = feature_dim * 2 + 1
    k1, k2, k3, k4 = jax.random.split(key, 4)
    # kaiming_normal_ (fan_in mode, a=0) -> std = sqrt(2 / fan_in)
    w1 = jax.random.normal(k1, (d_in, hidden_dim), jnp.float32) * math.sqrt(2.0 / d_in)
    w2 = jax.random.normal(k2, (hidden_dim, hidden_dim), jnp.float32) * math.sqrt(2.0 / hidden_dim)
    # nn.Linear default bias init: U(-1/sqrt(fan_in), 1/sqrt(fan_in))
    b1 = jax.random.uniform(k3, (1, hidden_dim), jnp.float32,
                            -1.0 / math.sqrt(d_in), 1.0 / math.sqrt(d_in))
    b2 = jax.random.uniform(k4, (1, hidden_dim), jnp.float32,
                            -1.0 / math.sqrt(hidden_dim), 1.0 / math.sqrt(hidden_dim))
    bn = dict(gamma=jnp.ones((1, hidden_dim), jnp.float32),
              beta=jnp.zeros((1, hidden_dim), jnp.float32),
              mean=jnp.zeros((1, hidden_dim), jnp.float32),
              var=jnp.ones((1, hidden_dim), jnp.float32))
    return dict(w1=w1, b1=b1, w2=w2, b2=b2, bn1=dict(bn), bn2=dict(bn))


def fold_params(raw, feature_dim, compute_dtype=jnp.bfloat16):
    """Fold eval-mode BatchNorm1d into the linears and split W1 for the kernel."""
    def bn_affine(bn):
        s = bn["gamma"] / jnp.sqrt(bn["var"] + BN_EPS)
        t = bn["beta"] - bn["mean"] * s
        return s, t

    s1, t1 = bn_affine(raw["bn1"])
    s2, t2 = bn_affine(raw["bn2"])
    # Folding a BN scale through LeakyReLU requires a strictly positive scale.
    if not bool(jnp.all(s1 > 0) & jnp.all(s2 > 0)):
        raise ValueError("BatchNorm fold through LeakyReLU requires positive scales")

    w1f = raw["w1"] * s1                       # scale output columns of W1
    b1f = raw["b1"] * s1
    w2f = raw["w2"] * s2                       # scale output columns of W2
    b2f = (raw["b2"] + t1 @ raw["w2"]) * s2    # BN1 shift folded through Linear2
    t2f = t2                                   # final BN2 shift (one in-kernel add)

    F = feature_dim
    return dict(
        # W1 halves kept f32: they are pre-projected (feats @ W1x) on the host.
        w1a=w1f[:F].astype(jnp.float32),
        w1b=w1f[F:2 * F].astype(jnp.float32),
        w1i=w1f[2 * F:2 * F + 1].astype(jnp.float32),
        b1=b1f.astype(jnp.float32),
        w2=w2f.astype(compute_dtype),          # MXU-streamed
        b2=b2f.astype(jnp.float32),
        t2=t2f.astype(jnp.float32),
    )


# ---------------------------------------------------------------------------
# References
# ---------------------------------------------------------------------------
def reference_forward_raw(feats, pairs, ious, raw):
    """Original module math (Linear -> LeakyReLU -> BN(eval) -> Dropout(id)) x2, in f32."""
    hi = jax.lax.Precision.HIGHEST
    x = jnp.concatenate([feats[pairs[:, 0]], feats[pairs[:, 1]], ious], axis=-1)

    def bn(h, p):
        return (h - p["mean"]) / jnp.sqrt(p["var"] + BN_EPS) * p["gamma"] + p["beta"]

    h = jnp.dot(x, raw["w1"], precision=hi) + raw["b1"]
    h = jnp.where(h >= 0, h, NEG_SLOPE * h)
    h = bn(h, raw["bn1"])
    h = jnp.dot(h, raw["w2"], precision=hi) + raw["b2"]
    h = jnp.where(h >= 0, h, NEG_SLOPE * h)
    h = bn(h, raw["bn2"])
    return h


def reference_forward_folded(feats, pairs, ious, params):
    """Mirrors the kernel's folded / pre-projected / bf16-streamed math (tight check)."""
    hi = jax.lax.Precision.HIGHEST
    f32 = jnp.float32
    cdt = params["w2"].dtype
    O = feats.shape[0]
    rhs = _build_rhs1(feats, params).astype(f32)                    # (2O+1, H)
    h = (rhs[pairs[:, 0]] + rhs[O + pairs[:, 1]]
         + ious.astype(cdt).astype(f32) * rhs[2 * O])
    h = h + params["b1"]
    h = jnp.maximum(h, NEG_SLOPE * h)
    h = h.astype(cdt).astype(f32)
    h2 = jnp.dot(h, params["w2"].astype(f32), precision=hi) + params["b2"]
    h2 = jnp.maximum(h2, NEG_SLOPE * h2)
    return h2 + params["t2"]


# ---------------------------------------------------------------------------
if __name__ == "__main__":
    feature_dim, hidden_dim = 64, 128
    num_objects, num_pairs = 8, 19           # P=19 exercises the ragged last block

    key = jax.random.PRNGKey(0)
    k_feat, k_pair, k_iou, k_param = jax.random.split(key, 4)

    feats = jax.random.normal(k_feat, (num_objects, feature_dim), jnp.float32)
    pairs = jax.random.randint(k_pair, (num_pairs, 2), 0, num_objects, jnp.int32)
    ious = jax.random.uniform(k_iou, (num_pairs, 1), jnp.float32)

    raw = init_raw_params(k_param, feature_dim, hidden_dim)
    params = fold_params(raw, feature_dim, compute_dtype=jnp.bfloat16)

    out = pairnet_forward(feats, pairs, ious, params, tm=1024)
    out = jax.block_until_ready(out)
    assert out.shape == (num_pairs, hidden_dim)

    # Tight check: kernel vs. an f32 re-implementation of its own folded/bf16 math.
    ref_folded = reference_forward_folded(feats, pairs, ious, params)
    assert jnp.allclose(out, ref_folded, atol=2e-2, rtol=2e-2), \
        float(jnp.max(jnp.abs(out - ref_folded)))

    # Sanity check vs. the original full-f32 module math (bf16 streaming -> loose tol).
    ref_raw = reference_forward_raw(feats, pairs, ious, raw)
    assert jnp.allclose(out, ref_raw, atol=2e-1, rtol=2e-1), \
        float(jnp.max(jnp.abs(out - ref_raw)))

    print("KERNEL_OK")
</pallas_src>

<mosaic_0001>
module attributes {stable_mosaic.version = 11 : i64} {
  func.func @pairnet_kernel(%arg0: i32, %arg1: memref<16x2xi32, #tpu.memory_space<vmem>>, %arg2: memref<16x1xf32, #tpu.memory_space<vmem>>, %arg3: memref<24x128xbf16, #tpu.memory_space<vmem>>, %arg4: memref<1x128xf32, #tpu.memory_space<vmem>>, %arg5: memref<128x128xbf16, #tpu.memory_space<vmem>>, %arg6: memref<1x128xf32, #tpu.memory_space<vmem>>, %arg7: memref<1x128xf32, #tpu.memory_space<vmem>>, %arg8: memref<16x128xf32, #tpu.memory_space<vmem>>) attributes {dimension_semantics = [#tpu.dimension_semantics<parallel>], iteration_bounds = array<i64: 2>, scalar_prefetch = 0 : i64, scratch_operands = 0 : i64, tpu.core_type = #tpu.core_type<tc>, window_params = [{transform_indices = @transform_0, window_bounds = array<i64: 16, 2>}, {transform_indices = @transform_1, window_bounds = array<i64: 16, 1>}, {pipeline_mode = #tpu.pipeline_mode<synchronous>, transform_indices = @transform_2, window_bounds = array<i64: 24, 128>}, {pipeline_mode = #tpu.pipeline_mode<synchronous>, transform_indices = @transform_3, window_bounds = array<i64: 1, 128>}, {pipeline_mode = #tpu.pipeline_mode<synchronous>, transform_indices = @transform_4, window_bounds = array<i64: 128, 128>}, {pipeline_mode = #tpu.pipeline_mode<synchronous>, transform_indices = @transform_5, window_bounds = array<i64: 1, 128>}, {pipeline_mode = #tpu.pipeline_mode<synchronous>, transform_indices = @transform_6, window_bounds = array<i64: 1, 128>}, {transform_indices = @transform_7, window_bounds = array<i64: 16, 128>}]} {
    %c0 = arith.constant 0 : index
    %c0_0 = arith.constant 0 : index
    %0 = vector.load %arg1[%c0, %c0_0] : memref<16x2xi32, #tpu.memory_space<vmem>>, vector<16x2xi32>
    %c0_1 = arith.constant 0 : index
    %c0_2 = arith.constant 0 : index
    %1 = vector.load %arg2[%c0_1, %c0_2] : memref<16x1xf32, #tpu.memory_space<vmem>>, vector<16x1xf32>
    %2 = tpu.iota {dimensions = array<i32: 1>} : vector<16x24xi32>
    %3 = vector.extract_strided_slice %0 {offsets = [0, 0], sizes = [16, 1], strides = [1, 1]} : vector<16x2xi32> to vector<16x1xi32>
    %4 = vector.broadcast %3 : vector<16x1xi32> to vector<16x24xi32>
    %5 = arith.cmpi eq, %2, %4 : vector<16x24xi32>
    %6 = vector.extract_strided_slice %0 {offsets = [0, 1], sizes = [16, 1], strides = [1, 1]} : vector<16x2xi32> to vector<16x1xi32>
    %c8_i32 = arith.constant 8 : i32
    %7 = vector.broadcast %c8_i32 : i32 to vector<16x1xi32>
    %8 = arith.addi %6, %7 : vector<16x1xi32>
    %9 = vector.broadcast %8 : vector<16x1xi32> to vector<16x24xi32>
    %10 = arith.cmpi eq, %2, %9 : vector<16x24xi32>
    %11 = arith.ori %5, %10 : vector<16x24xi1>
    %c16_i32 = arith.constant 16 : i32
    %12 = vector.broadcast %c16_i32 : i32 to vector<16x24xi32>
    %13 = arith.cmpi eq, %2, %12 : vector<16x24xi32>
    %14 = arith.extui %11 : vector<16x24xi1> to vector<16x24xi32>
    %15 = arith.sitofp %14 : vector<16x24xi32> to vector<16x24xf32>
    %16 = vector.shape_cast %1 : vector<16x1xf32> to vector<16x1xf32>
    %17 = vector.broadcast %16 : vector<16x1xf32> to vector<16x24xf32>
    %18 = arith.select %13, %17, %15 : vector<16x24xi1>, vector<16x24xf32>
    %19 = arith.truncf %18 : vector<16x24xf32> to vector<16x24xbf16>
    %c0_3 = arith.constant 0 : index
    %c0_4 = arith.constant 0 : index
    %20 = vector.load %arg3[%c0_3, %c0_4] : memref<24x128xbf16, #tpu.memory_space<vmem>>, vector<24x128xbf16>
    %cst = arith.constant dense<0.000000e+00> : vector<16x128xf32>
    %21 = tpu.matmul %19, %20, %cst {dimension_numbers = #tpu.dot_dimension_numbers<[1], [0], [0], [1], [0, 0, 1, 1], [], []>} : vector<16x24xbf16>, vector<24x128xbf16>, vector<16x128xf32> -> vector<16x128xf32>
    %c0_5 = arith.constant 0 : index
    %c0_6 = arith.constant 0 : index
    %22 = vector.load %arg4[%c0_5, %c0_6] : memref<1x128xf32, #tpu.memory_space<vmem>>, vector<1x128xf32>
    %23 = vector.broadcast %22 : vector<1x128xf32> to vector<16x128xf32>
    %24 = arith.addf %21, %23 : vector<16x128xf32>
    %cst_7 = arith.constant 0.00999999977 : f32
    %25 = vector.broadcast %cst_7 : f32 to vector<16x128xf32>
    %26 = arith.mulf %25, %24 : vector<16x128xf32>
    %27 = arith.maximumf %24, %26 : vector<16x128xf32>
    %28 = arith.truncf %27 : vector<16x128xf32> to vector<16x128xbf16>
    %c0_8 = arith.constant 0 : index
    %c0_9 = arith.constant 0 : index
    %29 = vector.load %arg5[%c0_8, %c0_9] : memref<128x128xbf16, #tpu.memory_space<vmem>>, vector<128x128xbf16>
    %cst_10 = arith.constant dense<0.000000e+00> : vector<16x128xf32>
    %30 = tpu.matmul %28, %29, %cst_10 {dimension_numbers = #tpu.dot_dimension_numbers<[1], [0], [0], [1], [0, 0, 1, 1], [], []>} : vector<16x128xbf16>, vector<128x128xbf16>, vector<16x128xf32> -> vector<16x128xf32>
    %c0_11 = arith.constant 0 : index
    %c0_12 = arith.constant 0 : index
    %31 = vector.load %arg6[%c0_11, %c0_12] : memref<1x128xf32, #tpu.memory_space<vmem>>, vector<1x128xf32>
    %32 = vector.broadcast %31 : vector<1x128xf32> to vector<16x128xf32>
    %33 = arith.addf %30, %32 : vector<16x128xf32>
    %cst_13 = arith.constant 0.00999999977 : f32
    %34 = vector.broadcast %cst_13 : f32 to vector<16x128xf32>
    %35 = arith.mulf %34, %33 : vector<16x128xf32>
    %36 = arith.maximumf %33, %35 : vector<16x128xf32>
    %c0_14 = arith.constant 0 : index
    %c0_15 = arith.constant 0 : index
    %37 = vector.load %arg7[%c0_14, %c0_15] : memref<1x128xf32, #tpu.memory_space<vmem>>, vector<1x128xf32>
    %38 = vector.broadcast %37 : vector<1x128xf32> to vector<16x128xf32>
    %39 = arith.addf %36, %38 : vector<16x128xf32>
    %c0_16 = arith.constant 0 : index
    %c0_17 = arith.constant 0 : index
    %40 = vector.load %arg8[%c0_16, %c0_17] : memref<16x128xf32, #tpu.memory_space<vmem>>, vector<16x128xf32>
    tpu.vector_store %arg8[%c0_16, %c0_17], %39 {strides = array<i32>} : memref<16x128xf32, #tpu.memory_space<vmem>>, vector<16x128xf32>,
    return
  }
  func.func @transform_0(%arg0: i32) -> (i32, i32) {
    %c0_i32 = arith.constant 0 : i32
    %c0_i32_0 = arith.constant 0 : i32
    return %arg0, %c0_i32 : i32, i32
  }
  func.func @transform_1(%arg0: i32) -> (i32, i32) {
    %c0_i32 = arith.constant 0 : i32
    %c0_i32_0 = arith.constant 0 : i32
    return %arg0, %c0_i32 : i32, i32
  }
  func.func @transform_2(%arg0: i32) -> (i32, i32) {
    %c0_i32 = arith.constant 0 : i32
    %c0_i32_0 = arith.constant 0 : i32
    %c0_i32_1 = arith.constant 0 : i32
    return %c0_i32, %c0_i32_0 : i32, i32
  }
  func.func @transform_3(%arg0: i32) -> (i32, i32) {
    %c0_i32 = arith.constant 0 : i32
    %c0_i32_0 = arith.constant 0 : i32
    %c0_i32_1 = arith.constant 0 : i32
    return %c0_i32, %c0_i32_0 : i32, i32
  }
  func.func @transform_4(%arg0: i32) -> (i32, i32) {
    %c0_i32 = arith.constant 0 : i32
    %c0_i32_0 = arith.constant 0 : i32
    %c0_i32_1 = arith.constant 0 : i32
    return %c0_i32, %c0_i32_0 : i32, i32
  }
  func.func @transform_5(%arg0: i32) -> (i32, i32) {
    %c0_i32 = arith.constant 0 : i32
    %c0_i32_0 = arith.constant 0 : i32
    %c0_i32_1 = arith.constant 0 : i32
    return %c0_i32, %c0_i32_0 : i32, i32
  }
  func.func @transform_6(%arg0: i32) -> (i32, i32) {
    %c0_i32 = arith.constant 0 : i32
    %c0_i32_0 = arith.constant 0 : i32
    %c0_i32_1 = arith.constant 0 : i32
    return %c0_i32, %c0_i32_0 : i32, i32
  }
  func.func @transform_7(%arg0: i32) -> (i32, i32) {
    %c0_i32 = arith.constant 0 : i32
    %c0_i32_0 = arith.constant 0 : i32
    return %arg0, %c0_i32 : i32, i32
  }
}

</mosaic_0001>

<llo_original>
// kernel: tpu_custom_call.1
$region0: #{tpu_custom_call.1}
  #allocation0 [shape = 'u32[]', space=smem, size = 0x4, offset = 0x4, fixed_abs, tag = 'smem constant byte address 0x4 - core index']
  #allocation1 [shape = 'u32[144,128]{1,0:T(1,128)}', space=vmem, size = 0x12000, scoped, tag = 'internal scratch']
  %s0 = inlined_call_operand.vmem [shape: s32[19,2], index: 0, kind: input, shape index: {}]
  %s1 = inlined_call_operand.vmem [shape: f32[19,1], index: 1, kind: input, shape index: {}]
  %s2 = inlined_call_operand.vmem [shape: bf16[24,128], index: 2, kind: input, shape index: {}]
  %s3 = inlined_call_operand.vmem [shape: f32[1,128], index: 3, kind: input, shape index: {}]
  %s4 = inlined_call_operand.hbm [shape: bf16[128,128], index: 4, kind: input, shape index: {}]
  %s5 = inlined_call_operand.vmem [shape: f32[1,128], index: 5, kind: input, shape index: {}]
  %s6 = inlined_call_operand.vmem [shape: f32[1,128], index: 6, kind: input, shape index: {}]
  %s7 = inlined_call_operand.hbm [shape: f32[19,128], index: 7, kind: output, shape index: {}]
  %s8 = sld [smem:[#allocation0]]
  $region65: #{tpu_custom_call.1} parent=0
    _
  %s10 = ssub.s32 1, %s8
  %s11 = scalar_select 0, %s10, %s8
  $region1: #{tpu_custom_call.1} parent=0
    #allocation2 [shape = 'u8[32768]{0}', space=vmem, size = 0x8000, scoped, tag = 'input window, operand 4, single buffered']
    #allocation3 [shape = 's32[2]{0}', space=sflag, size = 0x8, scoped, tag = 'scoped memory for tpu_custom_call.1']
    #allocation4 [shape = 's32[2]{0}', space=sflag, size = 0x8, scoped, tag = 'scoped memory for tpu_custom_call.1']
    #allocation5 [shape = 'u8[16384]{0}', space=vmem, size = 0x4000, scoped, tag = 'output window, operand 0']
    %12 = vsyncpa [#allocation3], 0
    %13 = vsyncpa [#allocation4], 0
    %s14 = scalar_lea.sflag [#allocation4], 1
    %15 = vsyncpa %s14, 0
    loop: start=0, step=1, limit=4
    $region2: #{tpu_custom_call.1} parent=1 // loop_pre_header
      _
    $region3: #{tpu_custom_call.1} parent=1 // loop_header
      %s17 = sphi 0, %s21
      %p18 = scmp.ge.s32.totalorder %s17, 4
      %s27 = sphi 0, %s29
      %s30 = sphi 0, %s27
      %s31 = sphi 0, %s30
      %s47 = sphi 0, %s31
      %s53 = sphi 0, %s55
      %s56 = sphi 0, %s53
      %s57 = sphi 0, %s56
      %s73 = sphi 0, %s57
      %s77 = sphi 0, %s77
      %s79 = sphi 0, %s77
      %s80 = sphi 0, %s79
      %s94 = sphi 0, %s80
      %s98 = sphi 0, %s98
      %s100 = sphi 0, %s98
      %s101 = sphi 0, %s100
      %s115 = sphi 0, %s101
      %s119 = sphi 0, %s119
      %s121 = sphi 0, %s119
      %s122 = sphi 0, %s121
      %s136 = sphi 0, %s122
      %s140 = sphi 0, %s140
      %s142 = sphi 0, %s140
      %s143 = sphi 0, %s142
      %s157 = sphi 0, %s143
      %s161 = sphi 0, %s161
      %s163 = sphi 0, %s161
      %s164 = sphi 0, %s163
      %s178 = sphi 0, %s164
      %s184 = sphi 0, %s186
      %s187 = sphi 0, %s184
      %s188 = sphi 0, %s187
      %s204 = sphi 0, %s188
    $region4: #{tpu_custom_call.1} parent=1 // loop_header_branch
      %20 = sbr.rel (%p18) target = $region8
    $region5: #{tpu_custom_call.1} parent=1 // loop_body
      %s22 = ssub.s32 %s17, 1
      %s23 = ssub.s32 %s17, 2
      %s24 = sadd.s32 %s17, 1
      %s25 = ssub.s32 %s17, %s24
      %p26 = scmp.eq.s32.totalorder %s25, 0
      %s28 = sadd.s32 %s27, 1
      %s29 = scalar_select %p26, %s27, %s28
      %p32 = pneg %p26
      %p33 = scmp.eq.s32.totalorder %s17, 1
      %p34 = por %p32, %p33
      %p35 = scmp.ne.s32.totalorder %s27, %s30
      %p36 = scmp.eq.s32.totalorder %s17, 0
      %p37 = por %p35, %p36
      %p38 = scmp.ne.s32.totalorder %s27, %s30
      %p39 = scmp.eq.s32.totalorder %s22, 1
      %p40 = por %p38, %p39
      %p41 = scmp.ne.s32.totalorder %s30, %s31
      %p42 = scmp.eq.s32.totalorder %s22, 0
      %p43 = por %p41, %p42
      %p44 = scmp.ne.s32.totalorder %s30, %s31
      %p45 = scmp.eq.s32.totalorder %s23, 1
      %p46 = por %p44, %p45
      %p48 = scmp.ne.s32.totalorder %s31, %s47
      %p49 = scmp.eq.s32.totalorder %s23, 0
      %p50 = por %p48, %p49
      %s51 = ssub.s32 %s17, %s24
      %p52 = scmp.eq.s32.totalorder %s51, 0
      %s54 = sadd.s32 %s53, 1
      %s55 = scalar_select %p52, %s53, %s54
      %p58 = pneg %p52
      %p59 = scmp.eq.s32.totalorder %s17, 1
      %p60 = por %p58, %p59
      %p61 = scmp.ne.s32.totalorder %s53, %s56
      %p62 = scmp.eq.s32.totalorder %s17, 0
      %p63 = por %p61, %p62
      %p64 = scmp.ne.s32.totalorder %s53, %s56
      %p65 = scmp.eq.s32.totalorder %s22, 1
      %p66 = por %p64, %p65
      %p67 = scmp.ne.s32.totalorder %s56, %s57
      %p68 = scmp.eq.s32.totalorder %s22, 0
      %p69 = por %p67, %p68
      %p70 = scmp.ne.s32.totalorder %s56, %s57
      %p71 = scmp.eq.s32.totalorder %s23, 1
      %p72 = por %p70, %p71
      %p74 = scmp.ne.s32.totalorder %s57, %s73
      %p75 = scmp.eq.s32.totalorder %s23, 0
      %p76 = por %p74, %p75
      %s78 = sadd.s32 %s77, 1
      %p81 = scmp.eq.s32.totalorder %s17, 1
      %p82 = scmp.ne.s32.totalorder %s77, %s79
      %p83 = scmp.eq.s32.totalorder %s17, 0
      %p84 = por %p82, %p83
      %p85 = scmp.ne.s32.totalorder %s77, %s79
      %p86 = scmp.eq.s32.totalorder %s22, 1
      %p87 = por %p85, %p86
      %p88 = scmp.ne.s32.totalorder %s79, %s80
      %p89 = scmp.eq.s32.totalorder %s22, 0
      %p90 = por %p88, %p89
      %p91 = scmp.ne.s32.totalorder %s79, %s80
      %p92 = scmp.eq.s32.totalorder %s23, 1
      %p93 = por %p91, %p92
      %p95 = scmp.ne.s32.totalorder %s80, %s94
      %p96 = scmp.eq.s32.totalorder %s23, 0
      %p97 = por %p95, %p96
      %s99 = sadd.s32 %s98, 1
      %p102 = scmp.eq.s32.totalorder %s17, 1
      %p103 = scmp.ne.s32.totalorder %s98, %s100
      %p104 = scmp.eq.s32.totalorder %s17, 0
      %p105 = por %p103, %p104
      %p106 = scmp.ne.s32.totalorder %s98, %s100
      %p107 = scmp.eq.s32.totalorder %s22, 1
      %p108 = por %p106, %p107
      %p109 = scmp.ne.s32.totalorder %s100, %s101
      %p110 = scmp.eq.s32.totalorder %s22, 0
      %p111 = por %p109, %p110
      %p112 = scmp.ne.s32.totalorder %s100, %s101
      %p113 = scmp.eq.s32.totalorder %s23, 1
      %p114 = por %p112, %p113
      %p116 = scmp.ne.s32.totalorder %s101, %s115
      %p117 = scmp.eq.s32.totalorder %s23, 0
      %p118 = por %p116, %p117
      %s120 = sadd.s32 %s119, 1
      %p123 = scmp.eq.s32.totalorder %s17, 1
      %p124 = scmp.ne.s32.totalorder %s119, %s121
      %p125 = scmp.eq.s32.totalorder %s17, 0
      %p126 = por %p124, %p125
      %p127 = scmp.ne.s32.totalorder %s119, %s121
      %p128 = scmp.eq.s32.totalorder %s22, 1
      %p129 = por %p127, %p128
      %p130 = scmp.ne.s32.totalorder %s121, %s122
      %p131 = scmp.eq.s32.totalorder %s22, 0
      %p132 = por %p130, %p131
      %p133 = scmp.ne.s32.totalorder %s121, %s122
      %p134 = scmp.eq.s32.totalorder %s23, 1
      %p135 = por %p133, %p134
      %p137 = scmp.ne.s32.totalorder %s122, %s136
      %p138 = scmp.eq.s32.totalorder %s23, 0
      %p139 = por %p137, %p138
      %s141 = sadd.s32 %s140, 1
      %p144 = scmp.eq.s32.totalorder %s17, 1
      %p145 = scmp.ne.s32.totalorder %s140, %s142
      %p146 = scmp.eq.s32.totalorder %s17, 0
      %p147 = por %p145, %p146
      %p148 = scmp.ne.s32.totalorder %s140, %s142
      %p149 = scmp.eq.s32.totalorder %s22, 1
      %p150 = por %p148, %p149
      %p151 = scmp.ne.s32.totalorder %s142, %s143
      %p152 = scmp.eq.s32.totalorder %s22, 0
      %p153 = por %p151, %p152
      %p154 = scmp.ne.s32.totalorder %s142, %s143
      %p155 = scmp.eq.s32.totalorder %s23, 1
      %p156 = por %p154, %p155
      %p158 = scmp.ne.s32.totalorder %s143, %s157
      %p159 = scmp.eq.s32.totalorder %s23, 0
      %p160 = por %p158, %p159
      %s162 = sadd.s32 %s161, 1
      %p165 = scmp.eq.s32.totalorder %s17, 1
      %p166 = scmp.ne.s32.totalorder %s161, %s163
      %p167 = scmp.eq.s32.totalorder %s17, 0
      %p168 = por %p166, %p167
      %p169 = scmp.ne.s32.totalorder %s161, %s163
      %p170 = scmp.eq.s32.totalorder %s22, 1
      %p171 = por %p169, %p170
      %p172 = scmp.ne.s32.totalorder %s163, %s164
      %p173 = scmp.eq.s32.totalorder %s22, 0
      %p174 = por %p172, %p173
      %p175 = scmp.ne.s32.totalorder %s163, %s164
      %p176 = scmp.eq.s32.totalorder %s23, 1
      %p177 = por %p175, %p176
      %p179 = scmp.ne.s32.totalorder %s164, %s178
      %p180 = scmp.eq.s32.totalorder %s23, 0
      %p181 = por %p179, %p180
      %s182 = ssub.s32 %s17, %s24
      %p183 = scmp.eq.s32.totalorder %s182, 0
      %s185 = sadd.s32 %s184, 1
      %s186 = scalar_select %p183, %s184, %s185
      %p189 = pneg %p183
      %p190 = scmp.eq.s32.totalorder %s17, 1
      %p191 = por %p189, %p190
      %p192 = scmp.ne.s32.totalorder %s184, %s187
      %p193 = scmp.eq.s32.totalorder %s17, 0
      %p194 = por %p192, %p193
      %p195 = scmp.ne.s32.totalorder %s184, %s187
      %p196 = scmp.eq.s32.totalorder %s22, 1
      %p197 = por %p195, %p196
      %p198 = scmp.ne.s32.totalorder %s187, %s188
      %p199 = scmp.eq.s32.totalorder %s22, 0
      %p200 = por %p198, %p199
      %p201 = scmp.ne.s32.totalorder %s187, %s188
      %p202 = scmp.eq.s32.totalorder %s23, 1
      %p203 = por %p201, %p202
      %p205 = scmp.ne.s32.totalorder %s188, %s204
      %p206 = scmp.eq.s32.totalorder %s23, 0
      %p207 = por %p205, %p206
      %p208 = scmp.le.s32.totalorder 1, %s17
      %p209 = scmp.lt.s32.totalorder %s17, 3
      %p210 = pnand %p208, %p209
      %p211 = pneg %p210
      // Predicated region
      $region9: #{tpu_custom_call.1} parent=5 // pred_check
        _
      $region10: #{tpu_custom_call.1} parent=5 // pred_check_branch
        %213 = sbr.rel (%p210) target = $region12
      $region11: #{tpu_custom_call.1} parent=5 // pred_region
        %s214 = ssub.s32 %s17, 1
        // Predicated region
        $region13: #{tpu_custom_call.1} parent=11 // pred_check
          %p215 = pneg %p90
        $region14: #{tpu_custom_call.1} parent=11 // pred_check_branch
          %217 = sbr.rel (%p215) target = $region16
        $region15: #{tpu_custom_call.1} parent=11 // pred_region
          _
        $region16: #{tpu_custom_call.1} parent=11 // pred_fallthru
          _
        // Predicated region
        $region17: #{tpu_custom_call.1} parent=11 // pred_check
          %p218 = pneg %p111
        $region18: #{tpu_custom_call.1} parent=11 // pred_check_branch
          %220 = sbr.rel (%p218) target = $region20
        $region19: #{tpu_custom_call.1} parent=11 // pred_region
          _
        $region20: #{tpu_custom_call.1} parent=11 // pred_fallthru
          _
        // Predicated region
        $region21: #{tpu_custom_call.1} parent=11 // pred_check
          %p221 = pneg %p132
        $region22: #{tpu_custom_call.1} parent=11 // pred_check_branch
          %223 = sbr.rel (%p221) target = $region24
        $region23: #{tpu_custom_call.1} parent=11 // pred_region
          %s225 = ssub.s32 1024, 1024
          %226 = vsyncadd [#allocation3], %s225
          %s227 = sshll.u32 [#allocation2], 4
          %s228 = int_to_ptr.vmem [resolvable:$true] %s227
          %233 = dma.hbm_to_vmem [thread:$0]  %s4, 1024, %s228, [#allocation3], 64, 64, 4
        $region24: #{tpu_custom_call.1} parent=11 // pred_fallthru
          _
        // Predicated region
        $region25: #{tpu_custom_call.1} parent=11 // pred_check
          %p234 = pneg %p153
        $region26: #{tpu_custom_call.1} parent=11 // pred_check_branch
          %236 = sbr.rel (%p234) target = $region28
        $region27: #{tpu_custom_call.1} parent=11 // pred_region
          _
        $region28: #{tpu_custom_call.1} parent=11 // pred_fallthru
          _
        // Predicated region
        $region29: #{tpu_custom_call.1} parent=11 // pred_check
          %p237 = pneg %p174
        $region30: #{tpu_custom_call.1} parent=11 // pred_check_branch
          %239 = sbr.rel (%p237) target = $region32
        $region31: #{tpu_custom_call.1} parent=11 // pred_region
          _
        $region32: #{tpu_custom_call.1} parent=11 // pred_fallthru
          _
      $region12: #{tpu_custom_call.1} parent=5 // pred_fallthru
        _
      %p240 = scmp.lt.s32.totalorder %s17, 2
      // Predicated region
      $region33: #{tpu_custom_call.1} parent=5 // pred_check
        %p241 = pneg %p240
      $region34: #{tpu_custom_call.1} parent=5 // pred_check_branch
        %243 = sbr.rel (%p241) target = $region36
      $region35: #{tpu_custom_call.1} parent=5 // pred_region
        // Predicated region
        $region37: #{tpu_custom_call.1} parent=35 // pred_check
          %p244 = pneg %p37
        $region38: #{tpu_custom_call.1} parent=35 // pred_check_branch
          %246 = sbr.rel (%p244) target = $region40
        $region39: #{tpu_custom_call.1} parent=35 // pred_region
          %s247 = smul.u32 2, %s17
          %s248 = ssub.s32 3, %s247
          %p249 = scmp.lt.s32.totalorder %s248, 2
          %s250 = scalar_select %p249, %s248, 2
          %s251 = smul.u32 128, %s250
          %p252 = scmp.lt.s32.totalorder %s247, 2
          %s253 = scalar_select %p252, %s247, 2
          %s254 = smul.addr %s253, 8
          %s255 = scalar_lea.vmem %s0, %s254
          %s256 = smul.u32 2, %s17
          %s257 = ssub.s32 3, %s256
          %p258 = scmp.lt.s32.totalorder %s257, 2
          %s259 = scalar_select %p258, %s257, 2
          %s260 = smul.u32 128, %s259
        $region40: #{tpu_custom_call.1} parent=35 // pred_fallthru
          _
        // Predicated region
        $region41: #{tpu_custom_call.1} parent=35 // pred_check
          %p261 = pneg %p63
        $region42: #{tpu_custom_call.1} parent=35 // pred_check_branch
          %263 = sbr.rel (%p261) target = $region44
        $region43: #{tpu_custom_call.1} parent=35 // pred_region
          %s264 = smul.u32 2, %s17
          %s265 = ssub.s32 3, %s264
          %p266 = scmp.lt.s32.totalorder %s265, 2
          %s267 = scalar_select %p266, %s265, 2
          %s268 = smul.u32 128, %s267
          %p269 = scmp.lt.s32.totalorder %s264, 2
          %s270 = scalar_select %p269, %s264, 2
          %s271 = smul.addr %s270, 8
          %s272 = scalar_lea.vmem %s1, %s271
          %s273 = smul.u32 2, %s17
          %s274 = ssub.s32 3, %s273
          %p275 = scmp.lt.s32.totalorder %s274, 2
          %s276 = scalar_select %p275, %s274, 2
          %s277 = smul.u32 128, %s276
        $region44: #{tpu_custom_call.1} parent=35 // pred_fallthru
          _
      $region36: #{tpu_custom_call.1} parent=5 // pred_fallthru
        _
      %p278 = scmp.le.s32.totalorder 1, %s17
      %p279 = scmp.lt.s32.totalorder %s17, 3
      %p280 = pnand %p278, %p279
      %p281 = pneg %p280
      // Predicated region
      $region45: #{tpu_custom_call.1} parent=5 // pred_check
        _
      $region46: #{tpu_custom_call.1} parent=5 // pred_check_branch
        %283 = sbr.rel (%p280) target = $region48
      $region47: #{tpu_custom_call.1} parent=5 // pred_region
        %s284 = ssub.s32 %s17, 1
        // Predicated region
        $region49: #{tpu_custom_call.1} parent=47 // pred_check
          %p285 = pneg %p132
        $region50: #{tpu_custom_call.1} parent=47 // pred_check_branch
          %287 = sbr.rel (%p285) target = $region52
        $region51: #{tpu_custom_call.1} parent=47 // pred_region
          %288 = dma.done [#allocation3], 1024
        $region52: #{tpu_custom_call.1} parent=47 // pred_fallthru
          _
        %s289 = smul.u32 2, %s22
        %s290 = ssub.s32 3, %s289
        %p291 = scmp.lt.s32.totalorder %s290, 2
        %s292 = scalar_select %p291, %s290, 2
        %s293 = smul.u32 128, %s292
        %p294 = scmp.lt.s32.totalorder %s289, 2
        %s295 = scalar_select %p294, %s289, 2
        %s296 = smul.addr %s295, 8
        %s297 = scalar_lea.vmem %s0, %s296
        %p298 = pneg %p43
        %p299 = pneg %p40
        %s300 = smul.u32 2, %s22
        %s301 = ssub.s32 3, %s300
        %p302 = scmp.lt.s32.totalorder %s301, 2
        %s303 = scalar_select %p302, %s301, 2
        %s304 = smul.u32 128, %s303
        %p305 = scmp.lt.s32.totalorder %s300, 2
        %s306 = scalar_select %p305, %s300, 2
        %s307 = smul.addr %s306, 8
        %s308 = scalar_lea.vmem %s1, %s307
        %p309 = pneg %p69
        %p310 = pneg %p66
        %p311 = pneg %p90
        %p312 = pneg %p87
        %p313 = pneg %p111
        %p314 = pneg %p108
        %p315 = pneg %p132
        %p316 = pneg %p129
        %p317 = pneg %p153
        %p318 = pneg %p150
        %p319 = pneg %p174
        %p320 = pneg %p171
        %p321 = pneg %p200
        %p322 = pneg %p197
        %s323 = sand.u32 %s187, 1
        %s324 = scalar_lea.sflag [#allocation4], %s323
        %s325 = sand.u32 %s187, 1
        %s326 = smul.addr %s325, 16
        %s327 = scalar_lea.vmem [#allocation5], %s326
        %s328 = smul.u32 2, %s22
        %s329 = ssub.s32 3, %s328
        %p330 = scmp.lt.s32.totalorder %s329, 2
        %s331 = scalar_select %p330, %s329, 2
        %s332 = smul.u32 128, %s331
        %p333 = scmp.lt.s32.totalorder %s328, 2
        %s334 = scalar_select %p333, %s328, 2
        %s335 = smul.addr %s334, 8
        %s336 = scalar_lea.vmem %s0, %s335
        %s337 = smul.u32 2, %s22
        %s338 = ssub.s32 3, %s337
        %p339 = scmp.lt.s32.totalorder %s338, 2
        %s340 = scalar_select %p339, %s338, 2
        %s341 = smul.u32 128, %s340
        %s342 = smul.u32 2, %s22
        %s343 = ssub.s32 3, %s342
        %p344 = scmp.lt.s32.totalorder %s343, 2
        %s345 = scalar_select %p344, %s343, 2
        %s346 = smul.u32 128, %s345
        %p347 = scmp.lt.s32.totalorder %s342, 2
        %s348 = scalar_select %p347, %s342, 2
        %s349 = smul.addr %s348, 8
        %s350 = scalar_lea.vmem %s1, %s349
        %s351 = smul.u32 2, %s22
        %s352 = ssub.s32 3, %s351
        %p353 = scmp.lt.s32.totalorder %s352, 2
        %s354 = scalar_select %p353, %s352, 2
        %s355 = smul.u32 128, %s354
        %s356 = smul.u32 2, %s22
        %s357 = ssub.s32 3, %s356
        %p358 = scmp.lt.s32.totalorder %s357, 2
        %s359 = scalar_select %p358, %s357, 2
        %s360 = smul.u32 128, %s359
        %v362 = vld [vmem:[%s336] sm:$0xff]
        %v363 = vld [vmem:[%s336 + $0x8] sm:$0xff]
        %v364 = vld [vmem:[%s350] sm:$0xff]
        %v365 = vld [vmem:[%s350 + $0x8] sm:$0xff]
        %v366 = vlaneseq
        %v367 = vand.u32 %v366, 127
        %368 = vset.pattern.permute.xlu0 0
        %369 = vperm.xlu0 %368, %v362
        %v370 = vpop.permute.xlu0 %369
        %371 = vset.pattern.permute.xlu0 0
        %372 = vperm.xlu0 %371, %v363
        %v373 = vpop.permute.xlu0 %372
        %vm374 = vcmp.eq.s32.totalorder %v367, %v370
        %vm375 = vcmp.eq.s32.totalorder %v367, %v373
        %v376 = vadd.s32 %v362, 8
        %v377 = vadd.s32 %v363, 8
        %378 = vset.pattern.permute.xlu0 1
        %379 = vperm.xlu0 %378, %v376
        %v380 = vpop.permute.xlu0 %379
        %381 = vset.pattern.permute.xlu0 1
        %382 = vperm.xlu0 %381, %v377
        %v383 = vpop.permute.xlu0 %382
        %vm384 = vcmp.eq.s32.totalorder %v367, %v380
        %vm385 = vcmp.eq.s32.totalorder %v367, %v383
        %vm386 = vmor %vm374, %vm384
        %vm387 = vmor %vm375, %vm385
        %vm388 = vcmp.eq.s32.totalorder %v367, 16
        %v389 = vsel %vm386, 1, 0
        %v390 = vsel %vm387, 1, 0
        %v391 = vcvt.s32.f32 %v389
        %v392 = vcvt.s32.f32 %v390
        %394 = vset.pattern.permute.xlu0 0
        %395 = vperm.xlu0 %394, %v364
        %v396 = vpop.permute.xlu0 %395
        %399 = vset.pattern.permute.xlu0 0
        %400 = vperm.xlu0 %399, %v365
        %v401 = vpop.permute.xlu0 %400
        %v403 = vsel %vm388, %v396, %v391
        %v404 = vsel %vm388, %v401, %v392
        %v405 = vpack.c.bf16 %v404, %v403
        %v406 = vld [vmem:[%s2] sm:$0xf]
        %v407 = vld [vmem:[%s2 + $0x4] sm:$0xf]
        %v408 = vld [vmem:[%s2 + $0x8] sm:$0xf]
        %v409 = vld [vmem:[%s3] sm:$0x1]
        %v411 = vlaneseq
        %v412 = vshrl.u32 %v411, 7
        %v413 = vsub.s32 0, %v412
        %v414 = vrot.slane %v409, %v413
        %v419 = vunpack.c.l.b16 %v406
        %v420 = vunpack.c.l.b16 %v407
        %v421 = vunpack.c.l.b16 %v408
        %v422 = vpack.c.b16 %v420, %v419
        %v423 = vpack.c.b16 %v421, %v421
        %vm425 = vcmask 195584
        %v427 = vsel %vm425, %v405, 0
        %vm429 = vcmask 1043456
        %v431 = vsel %vm429, %v423, 0
        %433 = vmatprep.subr.bf16.mxu0 0
        %434 = vmatpush1.bf16.msra.mxu0 0
        %435 = vmatprep.subr.bf16.mxu0 0
        %436 = vmatpush1.bf16.msra.mxu0 0
        %437 = vmatprep.subr.bf16.mxu0 0
        %438 = vmatpush1.bf16.msra.mxu0 0
        %439 = vmatprep.subr.bf16.mxu0 0
        %440 = vmatpush1.bf16.msra.mxu0 0
        %441 = vmatprep.subr.bf16.mxu0 0
        %442 = vmatpush1.bf16.msra.mxu0 0
        %443 = vmatprep.subr.bf16.mxu0 0
        %444 = vmatpush1.bf16.msra.mxu0 0
        %445 = vmatprep.subr.bf16.mxu0 0
        %446 = vmatpush1.bf16.msra.mxu0 %v431
        %447 = vmatprep.subr.bf16.mxu0 0
        %448 = vmatpush1.bf16.msra.mxu0 %v422
        %449 = vmatprep.subr.bf16.mxu0 0
        %450 = vmatpush2.bf16.msra.mxu0 0
        %451 = vmatprep.subr.bf16.mxu0 0
        %452 = vmatpush2.bf16.msra.mxu0 0
        %453 = vmatprep.subr.bf16.mxu0 0
        %454 = vmatpush2.bf16.msra.mxu0 0
        %455 = vmatprep.subr.bf16.mxu0 0
        %456 = vmatpush2.bf16.msra.mxu0 0
        %457 = vmatprep.subr.bf16.mxu0 0
        %458 = vmatpush2.bf16.msra.mxu0 0
        %459 = vmatprep.subr.bf16.mxu0 0
        %460 = vmatpush2.bf16.msra.mxu0 0
        %461 = vmatprep.subr.bf16.mxu0 0
        %462 = vmatpush2.bf16.msra.mxu0 0
        %463 = vmatprep.subr.bf16.mxu0 0
        %464 = vmatpush2.bf16.msra.mxu0 0
        %465 = vmatprep.mubr.bf16.mxu0 0
        %466 = vmatmul.mubr.bf16.gmra.mxu0 %v427
        %v467 = vpop.f32.mrf.mxu0
        %v468 = vadd.f32 %v414, %v467
        %v469 = vpop.f32.mrf.mxu0
        %v470 = vpop.f32.mrf.mxu0
        %v471 = vadd.f32 %v414, %v470
        %v472 = vpop.f32.mrf.mxu0
        %473 = vdwg.mxu0
        %v474 = vmul.f32 %v468, 0.01
        %v475 = vmul.f32 %v471, 0.01
        %v476 = vmax.f32 %v468, %v474
        %v477 = vmax.f32 %v471, %v475
        %v478 = vpack.c.bf16 %v477, %v476
        %v479 = vld [vmem:[#allocation2] sm:$0xf]
        %v480 = vld [vmem:[#allocation2 + $0x4] sm:$0xf]
        %v481 = vld [vmem:[#allocation2 + $0x8] sm:$0xf]
        %v482 = vld [vmem:[#allocation2 + $0xc] sm:$0xf]
        %v483 = vld [vmem:[#allocation2 + $0x10] sm:$0xf]
        %v484 = vld [vmem:[#allocation2 + $0x14] sm:$0xf]
        %v485 = vld [vmem:[#allocation2 + $0x18] sm:$0xf]
        %v486 = vld [vmem:[#allocation2 + $0x1c] sm:$0xf]
        %v487 = vld [vmem:[#allocation2 + $0x20] sm:$0xf]
        %v488 = vld [vmem:[#allocation2 + $0x24] sm:$0xf]
        %v489 = vld [vmem:[#allocation2 + $0x28] sm:$0xf]
        %v490 = vld [vmem:[#allocation2 + $0x2c] sm:$0xf]
        %v491 = vld [vmem:[#allocation2 + $0x30] sm:$0xf]
        %v492 = vld [vmem:[#allocation2 + $0x34] sm:$0xf]
        %v493 = vld [vmem:[#allocation2 + $0x38] sm:$0xf]
        %v494 = vld [vmem:[#allocation2 + $0x3c] sm:$0xf]
        %v495 = vld [vmem:[%s5] sm:$0x1]
        %v497 = vlaneseq
        %v498 = vshrl.u32 %v497, 7
        %v499 = vsub.s32 0, %v498
        %v500 = vrot.slane %v495, %v499
        %v518 = vunpack.c.l.b16 %v479
        %v519 = vunpack.c.l.b16 %v480
        %v520 = vunpack.c.l.b16 %v481
        %v521 = vunpack.c.l.b16 %v482
        %v522 = vunpack.c.l.b16 %v483
        %v523 = vunpack.c.l.b16 %v484
        %v524 = vunpack.c.l.b16 %v485
        %v525 = vunpack.c.l.b16 %v486
        %v526 = vunpack.c.l.b16 %v487
        %v527 = vunpack.c.l.b16 %v488
        %v528 = vunpack.c.l.b16 %v489
        %v529 = vunpack.c.l.b16 %v490
        %v530 = vunpack.c.l.b16 %v491
        %v531 = vunpack.c.l.b16 %v492
        %v532 = vunpack.c.l.b16 %v493
        %v533 = vunpack.c.l.b16 %v494
        %v534 = vpack.c.b16 %v519, %v518
        %v535 = vpack.c.b16 %v521, %v520
        %v536 = vpack.c.b16 %v523, %v522
        %v537 = vpack.c.b16 %v525, %v524
        %v538 = vpack.c.b16 %v527, %v526
        %v539 = vpack.c.b16 %v529, %v528
        %v540 = vpack.c.b16 %v531, %v530
        %v541 = vpack.c.b16 %v533, %v532
        %550 = vmatprep.subr.bf16.mxu0 0
        %551 = vmatpush1.bf16.msra.mxu0 %v541
        %552 = vmatprep.subr.bf16.mxu0 0
        %553 = vmatpush1.bf16.msra.mxu0 %v540
        %554 = vmatprep.subr.bf16.mxu0 0
        %555 = vmatpush1.bf16.msra.mxu0 %v539
        %556 = vmatprep.subr.bf16.mxu0 0
        %557 = vmatpush1.bf16.msra.mxu0 %v538
        %558 = vmatprep.subr.bf16.mxu0 0
        %559 = vmatpush1.bf16.msra.mxu0 %v537
        %560 = vmatprep.subr.bf16.mxu0 0
        %561 = vmatpush1.bf16.msra.mxu0 %v536
        %562 = vmatprep.subr.bf16.mxu0 0
        %563 = vmatpush1.bf16.msra.mxu0 %v535
        %564 = vmatprep.subr.bf16.mxu0 0
        %565 = vmatpush1.bf16.msra.mxu0 %v534
        %566 = vmatprep.subr.bf16.mxu0 0
        %567 = vmatpush2.bf16.msra.mxu0 0
        %568 = vmatprep.subr.bf16.mxu0 0
        %569 = vmatpush2.bf16.msra.mxu0 0
        %570 = vmatprep.subr.bf16.mxu0 0
        %571 = vmatpush2.bf16.msra.mxu0 0
        %572 = vmatprep.subr.bf16.mxu0 0
        %573 = vmatpush2.bf16.msra.mxu0 0
        %574 = vmatprep.subr.bf16.mxu0 0
        %575 = vmatpush2.bf16.msra.mxu0 0
        %576 = vmatprep.subr.bf16.mxu0 0
        %577 = vmatpush2.bf16.msra.mxu0 0
        %578 = vmatprep.subr.bf16.mxu0 0
        %579 = vmatpush2.bf16.msra.mxu0 0
        %580 = vmatprep.subr.bf16.mxu0 0
        %581 = vmatpush2.bf16.msra.mxu0 0
        %582 = vmatprep.mubr.bf16.mxu0 0
        %583 = vmatmul.mubr.bf16.gmra.mxu0 %v478
        %v584 = vpop.f32.mrf.mxu0
        %v585 = vadd.f32 %v500, %v584
        %v586 = vpop.f32.mrf.mxu0
        %v587 = vpop.f32.mrf.mxu0
        %v588 = vadd.f32 %v500, %v587
        %v589 = vpop.f32.mrf.mxu0
        %590 = vdwg.mxu0
        %v591 = vmul.f32 %v585, 0.01
        %v592 = vmul.f32 %v588, 0.01
        %v593 = vmax.f32 %v585, %v591
        %v594 = vmax.f32 %v588, %v592
        %v595 = vld [vmem:[%s6] sm:$0x1]
        %v597 = vlaneseq
        %v598 = vshrl.u32 %v597, 7
        %v599 = vsub.s32 0, %v598
        %v600 = vrot.slane %v595, %v599
        %v602 = vadd.f32 %v593, %v600
        %v603 = vadd.f32 %v594, %v600
        %604 = vst [vmem:[%s327] sm:$0xff] %v602
        %605 = vst [vmem:[%s327 + $0x8] sm:$0xff] %v603
        %s606 = sand.u32 %s187, 1
        %s607 = scalar_lea.sflag [#allocation4], %s606
        %s608 = sand.u32 %s187, 1
        %s609 = smul.addr %s608, 16
        %s610 = scalar_lea.vmem [#allocation5], %s609
        // Predicated region
        $region53: #{tpu_custom_call.1} parent=47 // pred_check
          %p611 = pneg %p197
        $region54: #{tpu_custom_call.1} parent=47 // pred_check_branch
          %613 = sbr.rel (%p611) target = $region56
        $region55: #{tpu_custom_call.1} parent=47 // pred_region
          %s614 = smul.u32 2, %s22
          %s615 = ssub.s32 3, %s614
          %p616 = scmp.lt.s32.totalorder %s615, 2
          %s617 = scalar_select %p616, %s615, 2
          %s618 = smul.u32 128, %s617
          %s620 = ssub.s32 256, %s618
          %621 = vsyncadd %s607, %s620
          %p622 = scmp.ne.s32.totalorder 0, %s618
          %s623 = smul.addr %s614, 128
          %s624 = scalar_lea.hbm %s7, %s623
          %s625 = smul.u32 8, %s617
          %s626 = sshll.u32 %s610, 4
          %s627 = int_to_ptr.vmem [resolvable:$true] %s626
          %s628 = sshll.u32 %s625, 4
          %632 = dma.vmem_to_hbm [thread:$0]  (%p622), %s627, %s628, %s624, %s607, 128, 128, 8
        $region56: #{tpu_custom_call.1} parent=47 // pred_fallthru
          _
      $region48: #{tpu_custom_call.1} parent=5 // pred_fallthru
        _
      %p633 = scmp.le.s32.totalorder 2, %s17
      // Predicated region
      $region57: #{tpu_custom_call.1} parent=5 // pred_check
        %p634 = pneg %p633
      $region58: #{tpu_custom_call.1} parent=5 // pred_check_branch
        %636 = sbr.rel (%p634) target = $region60
      $region59: #{tpu_custom_call.1} parent=5 // pred_region
        %s637 = ssub.s32 %s17, 2
        // Predicated region
        $region61: #{tpu_custom_call.1} parent=59 // pred_check
          %p638 = pneg %p203
        $region62: #{tpu_custom_call.1} parent=59 // pred_check_branch
          %640 = sbr.rel (%p638) target = $region64
        $region63: #{tpu_custom_call.1} parent=59 // pred_region
          %s641 = sand.u32 %s188, 1
          %s642 = scalar_lea.sflag [#allocation4], %s641
          %s643 = sand.u32 %s188, 1
          %s644 = smul.addr %s643, 16
          %s645 = scalar_lea.vmem [#allocation5], %s644
          %646 = dma.done %s642, 256
        $region64: #{tpu_custom_call.1} parent=59 // pred_fallthru
          _
      $region60: #{tpu_custom_call.1} parent=5 // pred_fallthru
        _
    $region6: #{tpu_custom_call.1} parent=1 // loop_footer
      %s21 = sadd.s32 1, %s17
    $region7: #{tpu_custom_call.1} parent=1 // loop_footer_branch
      %16 = sbr.rel target = $region3
    $region8: #{tpu_custom_call.1} parent=1 // loop_exit
      _
    %647 = vsyncpa [#allocation3], 1
    %s648 = scalar_lea.sflag [#allocation3], 1
    %649 = vsyncpa %s648, 1
    %650 = vsyncpa [#allocation4], 1
    %s651 = scalar_lea.sflag [#allocation4], 1
    %652 = vsyncpa %s651, 1

</llo_original>
